<compile_context>
chip_gen: v6e
topology: v6e:2x2x1
jax: 0.10.0
libtpu: 0.0.40
codegen_flags: <defaults>
</compile_context>

<pallas_src>
import functools

import jax
import jax.numpy as jnp
import numpy as np
from jax import lax
from jax.experimental import pallas as pl
from jax.experimental.pallas import tpu as pltpu


def _ca_kernel(x_ref, params_ref, o_ref, *, cr, hw_chunk):
    """Fused CALayer for one batch tile.

    Refs:
      x_ref      : (Bt, C, HW)      input, HW on the lane axis (lane-dense)
      params_ref : (C, 3*Cr + 1)    packed MLP params (single DMA):
                     cols [0,Cr)        -> w1^T          (C, Cr)
                     cols [Cr,2Cr)      -> w2             (C, Cr)
                     col  2Cr           -> b2              (C, 1)
                     cols [2Cr+1,3Cr+1) -> b1 broadcast    (C, Cr)
      o_ref      : (Bt, C, HW)      output
    """
    Bt, C, HW = x_ref.shape
    n_chunks = HW // hw_chunk
    inv_hw = 1.0 / float(HW)

    w1t = params_ref[:, 0:cr].astype(jnp.float32)                       # (C, Cr)
    w2 = params_ref[:, cr:2 * cr].astype(jnp.float32)                   # (C, Cr)
    b2 = params_ref[:, 2 * cr:2 * cr + 1].astype(jnp.float32)           # (C, 1)
    b1 = params_ref[0:1, 2 * cr + 1:3 * cr + 1].astype(jnp.float32)     # (1, Cr)

    # ---- Phase 1: global average pool over HW (f32 accumulation) ----
    if n_chunks == 1:
        pooled = jnp.sum(x_ref[...].astype(jnp.float32), axis=2, keepdims=True)
    else:
        def pool_body(i, acc):
            start = pl.multiple_of(i * hw_chunk, hw_chunk)
            xs = x_ref[:, :, pl.ds(start, hw_chunk)].astype(jnp.float32)
            return acc + jnp.sum(xs, axis=2, keepdims=True)
        pooled = lax.fori_loop(0, n_chunks, pool_body,
                               jnp.zeros((Bt, C, 1), jnp.float32))
    pooled = pooled * inv_hw                                             # (Bt, C, 1)

    # ---- Squeeze-excite MLP on the VPU (no degenerate MXU matmuls) ----
    # y1[b, j] = relu( sum_c pooled[b, c] * w1[j, c] + b1[j] )
    y1 = jnp.sum(pooled * w1t[None, :, :], axis=1, keepdims=True)        # (Bt, 1, Cr)
    y1 = jnp.maximum(y1 + b1[None, :, :], 0.0)                           # (Bt, 1, Cr)
    # y2[b, c] = sum_j w2[c, j] * y1[b, j] + b2[c]
    y2 = jnp.sum(w2[None, :, :] * y1, axis=2, keepdims=True)             # (Bt, C, 1)
    y2 = y2 + b2[None, :, :]                                             # (Bt, C, 1)

    # Sigmoid gate (EUP exp); very negative y2 saturates cleanly to 0.
    scale = 1.0 / (1.0 + jnp.exp(-y2))                                   # (Bt, C, 1)
    scale = scale.astype(o_ref.dtype)

    # ---- Phase 2: per-channel rescale; re-read x from VMEM (cheap) so vreg
    #      live ranges stay bounded for MiB-scale blocks ----
    if n_chunks == 1:
        o_ref[...] = (x_ref[...] * scale).astype(o_ref.dtype)
    else:
        def rescale_body(i, carry):
            start = pl.multiple_of(i * hw_chunk, hw_chunk)
            idx = pl.ds(start, hw_chunk)
            o_ref[:, :, idx] = (x_ref[:, :, idx] * scale).astype(o_ref.dtype)
            return carry
        lax.fori_loop(0, n_chunks, rescale_body, 0)


def _pick_batch_tile(batch, per_image_bytes, target_bytes, min_steps=2):
    """Largest Bt dividing `batch` with block <= target_bytes and, when possible,
    at least `min_steps` grid steps (so both v7x TensorCores get work)."""
    max_by_size = max(1, target_bytes // max(1, per_image_bytes))
    max_by_steps = max(1, batch // min_steps) if batch >= min_steps else batch
    cap = max(1, min(batch, max_by_size, max_by_steps))
    bt = 1
    for d in range(1, cap + 1):
        if batch % d == 0:
            bt = d
    return bt


def _pick_hw_chunk(hw, max_chunk=2048):
    """Chunk size for in-kernel HW loops: full HW if small, else the largest
    multiple-of-128 divisor of HW that is <= max_chunk (fallback: full HW)."""
    if hw <= max_chunk:
        return hw
    for c in range(max_chunk - max_chunk % 128, 127, -128):
        if hw % c == 0:
            return c
    return hw


def calayer_forward(x_nchw, w1, b1, w2, b2, *, target_block_bytes=4 << 20):
    """CALayer forward.

    x_nchw : (B, C, H, W)  like the PyTorch module
    w1     : (Cr, C)  == torch conv_du[0].weight.squeeze()
    b1     : (Cr,)    == torch conv_du[0].bias
    w2     : (C, Cr)  == torch conv_du[2].weight.squeeze()
    b2     : (C,)     == torch conv_du[2].bias
    """
    B, C, H, W = x_nchw.shape
    Cr = w1.shape[0]
    HW = H * W
    itemsize = jnp.dtype(x_nchw.dtype).itemsize

    x_flat = x_nchw.reshape(B, C, HW)        # free reshape, stays lane-dense

    # Pack all MLP params into one (C, 3*Cr+1) f32 slab -> a single small DMA.
    w1t = jnp.transpose(w1, (1, 0)).astype(jnp.float32)                  # (C, Cr)
    w2f = w2.astype(jnp.float32)                                         # (C, Cr)
    b2c = b2.reshape(C, 1).astype(jnp.float32)                           # (C, 1)
    b1bc = jnp.broadcast_to(b1.reshape(1, Cr).astype(jnp.float32), (C, Cr))
    params = jnp.concatenate([w1t, w2f, b2c, b1bc], axis=1)              # (C, 3Cr+1)
    P = 3 * Cr + 1

    per_image_bytes = C * HW * itemsize
    Bt = _pick_batch_tile(B, per_image_bytes, target_block_bytes)
    hw_chunk = _pick_hw_chunk(HW)
    block_bytes = Bt * per_image_bytes
    # Double-buffered input + output ~= 4x block bytes; add headroom, cap v7x-safe.
    vmem_limit = int(min(48 << 20, max(16 << 20, 4 * block_bytes + (4 << 20))))

    kernel = functools.partial(_ca_kernel, cr=Cr, hw_chunk=hw_chunk)

    cost = pl.CostEstimate(
        flops=int(3 * B * C * HW + 4 * B * C * Cr),
        transcendentals=int(B * C),
        bytes_accessed=int(2 * B * C * HW * itemsize + params.size * 4),
    )

    out_flat = pl.pallas_call(
        kernel,
        out_shape=jax.ShapeDtypeStruct((B, C, HW), x_nchw.dtype),
        grid=(B // Bt,),
        in_specs=[
            pl.BlockSpec((Bt, C, HW), lambda b: (b, 0, 0)),   # x (batch tile)
            pl.BlockSpec((C, P), lambda b: (0, 0)),           # packed params
        ],
        out_specs=pl.BlockSpec((Bt, C, HW), lambda b: (b, 0, 0)),
        compiler_params=pltpu.CompilerParams(
            dimension_semantics=("parallel",),
            vmem_limit_bytes=vmem_limit),
        cost_estimate=cost,
    )(x_flat, params)

    # TODO(synk): if a single image (C*HW) ever exceeds the VMEM budget, fall back
    # to a two-pass grid (B, HW_tiles) with an "arbitrary" HW axis: scratch
    # accumulator + pl.when init/finalize for the pool, then a second streaming
    # pass for the gate + rescale (1.5x traffic, still full-bandwidth).
    return out_flat.reshape(B, C, H, W)


# ---------------- pure-JAX reference (for verification) ----------------
def calayer_reference(x, w1, b1, w2, b2):
    y = jnp.mean(x, axis=(2, 3))                         # (B, C)  avg pool
    y = jnp.maximum(y @ w1.T + b1, 0.0)                  # (B, Cr) conv1 + relu
    y = y @ w2.T + b2                                    # (B, C)  conv2
    y = 1.0 / (1.0 + jnp.exp(-y))                        # sigmoid
    return x * y[:, :, None, None]                       # channel rescale


if __name__ == "__main__":
    # reduction=16 requires C >= 16, so use B=2, C=32 (-> Cr=2), 16x16 spatial.
    B, C, H, W = 2, 32, 16, 16
    REDUCTION = 16
    Cr = C // REDUCTION

    key = jax.random.PRNGKey(0)
    kx, k1, k2, k3, k4 = jax.random.split(key, 5)
    x = jax.random.normal(kx, (B, C, H, W), dtype=jnp.float32)
    w1 = 0.3 * jax.random.normal(k1, (Cr, C), dtype=jnp.float32)
    b1 = 0.1 * jax.random.normal(k2, (Cr,), dtype=jnp.float32)
    w2 = 0.3 * jax.random.normal(k3, (C, Cr), dtype=jnp.float32)
    b2 = 0.1 * jax.random.normal(k4, (C,), dtype=jnp.float32)

    out = jax.jit(calayer_forward)(x, w1, b1, w2, b2)
    out = jax.block_until_ready(out)

    ref = calayer_reference(x, w1, b1, w2, b2)
    assert out.shape == (B, C, H, W)
    np.testing.assert_allclose(np.asarray(out), np.asarray(ref),
                               rtol=1e-5, atol=1e-5)
    print("KERNEL_OK")
</pallas_src>

<mosaic_0001>
module attributes {stable_mosaic.version = 11 : i64} {
  func.func @_ca_kernel(%arg0: i32, %arg1: memref<1x32x256xf32, #tpu.memory_space<vmem>>, %arg2: memref<32x7xf32, #tpu.memory_space<vmem>>, %arg3: memref<1x32x256xf32, #tpu.memory_space<vmem>>) attributes {dimension_semantics = [#tpu.dimension_semantics<parallel>], iteration_bounds = array<i64: 2>, scalar_prefetch = 0 : i64, scratch_operands = 0 : i64, tpu.core_type = #tpu.core_type<tc>, window_params = [{transform_indices = @transform_0, window_bounds = array<i64: 1, 32, 256>}, {pipeline_mode = #tpu.pipeline_mode<synchronous>, transform_indices = @transform_1, window_bounds = array<i64: 32, 7>}, {transform_indices = @transform_2, window_bounds = array<i64: 1, 32, 256>}]} {
    %c0 = arith.constant 0 : index
    %c0_0 = arith.constant 0 : index
    %0 = vector.load %arg2[%c0, %c0_0] : memref<32x7xf32, #tpu.memory_space<vmem>>, vector<32x2xf32>
    %c0_1 = arith.constant 0 : index
    %c2 = arith.constant 2 : index
    %1 = vector.load %arg2[%c0_1, %c2] : memref<32x7xf32, #tpu.memory_space<vmem>>, vector<32x2xf32>
    %c0_2 = arith.constant 0 : index
    %c4 = arith.constant 4 : index
    %2 = vector.load %arg2[%c0_2, %c4] : memref<32x7xf32, #tpu.memory_space<vmem>>, vector<32x1xf32>
    %c0_3 = arith.constant 0 : index
    %c5 = arith.constant 5 : index
    %3 = vector.load %arg2[%c0_3, %c5] : memref<32x7xf32, #tpu.memory_space<vmem>>, vector<1x2xf32>
    %c0_4 = arith.constant 0 : index
    %c0_5 = arith.constant 0 : index
    %c0_6 = arith.constant 0 : index
    %4 = vector.load %arg1[%c0_4, %c0_5, %c0_6] : memref<1x32x256xf32, #tpu.memory_space<vmem>>, vector<1x32x256xf32>
    %cst = arith.constant dense<0.000000e+00> : vector<1x32xf32>
    %5 = vector.multi_reduction <add>, %4, %cst [2] : vector<1x32x256xf32> to vector<1x32xf32>
    %6 = vector.shape_cast %5 : vector<1x32xf32> to vector<1x32x1xf32>
    %cst_7 = arith.constant 3.906250e-03 : f32
    %7 = vector.broadcast %cst_7 : f32 to vector<1x32x1xf32>
    %8 = arith.mulf %6, %7 : vector<1x32x1xf32>
    %9 = vector.shape_cast %0 : vector<32x2xf32> to vector<1x32x2xf32>
    %10 = vector.broadcast %8 : vector<1x32x1xf32> to vector<1x32x2xf32>
    %11 = arith.mulf %10, %9 : vector<1x32x2xf32>
    %cst_8 = arith.constant dense<0.000000e+00> : vector<1x2xf32>
    %12 = vector.multi_reduction <add>, %11, %cst_8 [1] : vector<1x32x2xf32> to vector<1x2xf32>
    %13 = vector.shape_cast %12 : vector<1x2xf32> to vector<1x1x2xf32>
    %14 = vector.shape_cast %3 : vector<1x2xf32> to vector<1x1x2xf32>
    %15 = arith.addf %13, %14 : vector<1x1x2xf32>
    %cst_9 = arith.constant 0.000000e+00 : f32
    %16 = vector.broadcast %cst_9 : f32 to vector<1x1x2xf32>
    %17 = arith.maximumf %15, %16 : vector<1x1x2xf32>
    %18 = vector.shape_cast %1 : vector<32x2xf32> to vector<1x32x2xf32>
    %19 = vector.broadcast %17 : vector<1x1x2xf32> to vector<1x32x2xf32>
    %20 = arith.mulf %18, %19 : vector<1x32x2xf32>
    %cst_10 = arith.constant dense<0.000000e+00> : vector<1x32xf32>
    %21 = vector.multi_reduction <add>, %20, %cst_10 [2] : vector<1x32x2xf32> to vector<1x32xf32>
    %22 = vector.shape_cast %21 : vector<1x32xf32> to vector<1x32x1xf32>
    %23 = vector.shape_cast %2 : vector<32x1xf32> to vector<1x32x1xf32>
    %24 = arith.addf %22, %23 : vector<1x32x1xf32>
    %cst_11 = arith.constant 0.000000e+00 : f32
    %25 = vector.broadcast %cst_11 : f32 to vector<1x32x1xf32>
    %26 = arith.subf %25, %24 : vector<1x32x1xf32>
    %27 = math.exp %26 : vector<1x32x1xf32>
    %cst_12 = arith.constant 1.000000e+00 : f32
    %28 = vector.broadcast %cst_12 : f32 to vector<1x32x1xf32>
    %29 = arith.addf %28, %27 : vector<1x32x1xf32>
    %cst_13 = arith.constant 1.000000e+00 : f32
    %30 = vector.broadcast %cst_13 : f32 to vector<1x32x1xf32>
    %31 = arith.divf %30, %29 : vector<1x32x1xf32>
    %c0_14 = arith.constant 0 : index
    %c0_15 = arith.constant 0 : index
    %c0_16 = arith.constant 0 : index
    %32 = vector.load %arg1[%c0_14, %c0_15, %c0_16] : memref<1x32x256xf32, #tpu.memory_space<vmem>>, vector<1x32x256xf32>
    %33 = vector.broadcast %31 : vector<1x32x1xf32> to vector<1x32x256xf32>
    %34 = arith.mulf %32, %33 : vector<1x32x256xf32>
    %c0_17 = arith.constant 0 : index
    %c0_18 = arith.constant 0 : index
    %c0_19 = arith.constant 0 : index
    %35 = vector.load %arg3[%c0_17, %c0_18, %c0_19] : memref<1x32x256xf32, #tpu.memory_space<vmem>>, vector<1x32x256xf32>
    tpu.vector_store %arg3[%c0_17, %c0_18, %c0_19], %34 {strides = array<i32>} : memref<1x32x256xf32, #tpu.memory_space<vmem>>, vector<1x32x256xf32>,
    return
  }
  func.func @transform_0(%arg0: i32) -> (i32, i32, i32) {
    %c0_i32 = arith.constant 0 : i32
    %c0_i32_0 = arith.constant 0 : i32
    %c0_i32_1 = arith.constant 0 : i32
    return %arg0, %c0_i32, %c0_i32_0 : i32, i32, i32
  }
  func.func @transform_1(%arg0: i32) -> (i32, i32) {
    %c0_i32 = arith.constant 0 : i32
    %c0_i32_0 = arith.constant 0 : i32
    %c0_i32_1 = arith.constant 0 : i32
    return %c0_i32, %c0_i32_0 : i32, i32
  }
  func.func @transform_2(%arg0: i32) -> (i32, i32, i32) {
    %c0_i32 = arith.constant 0 : i32
    %c0_i32_0 = arith.constant 0 : i32
    %c0_i32_1 = arith.constant 0 : i32
    return %arg0, %c0_i32, %c0_i32_0 : i32, i32, i32
  }
}

</mosaic_0001>

<llo_original>
// kernel: calayer_forward.1
$region0: #{calayer_forward.1}
  #allocation0 [shape = 'u32[]', space=smem, size = 0x4, offset = 0x4, fixed_abs, tag = 'smem constant byte address 0x4 - core index']
  #allocation1 [shape = 'u32[144,128]{1,0:T(1,128)}', space=vmem, size = 0x12000, scoped, tag = 'internal scratch']
  %s0 = inlined_call_operand.vmem [shape: f32[2,32,256], index: 0, kind: input, shape index: {}]
  %s1 = inlined_call_operand.vmem [shape: f32[32,7], index: 1, kind: input, shape index: {}]
  %s2 = inlined_call_operand.vmem [shape: f32[2,32,256], index: 2, kind: output, shape index: {}]
  %s3 = sld [smem:[#allocation0]]
  $region41: #{calayer_forward.1} parent=0
    _
  %s5 = ssub.s32 1, %s3
  %s6 = scalar_select 0, %s5, %s3
  loop: start=0, step=1, limit=4
  $region2: #{calayer_forward.1} parent=0 // loop_pre_header
    _
  $region3: #{calayer_forward.1} parent=0 // loop_header
    %s8 = sphi 0, %s12
    %p9 = scmp.ge.s32.totalorder %s8, 4
    %s18 = sphi 0, %s20
    %s21 = sphi 0, %s18
    %s22 = sphi 0, %s21
    %s38 = sphi 0, %s22
    %s42 = sphi 0, %s42
    %s44 = sphi 0, %s42
    %s45 = sphi 0, %s44
    %s59 = sphi 0, %s45
    %s65 = sphi 0, %s67
    %s68 = sphi 0, %s65
    %s69 = sphi 0, %s68
    %s85 = sphi 0, %s69
  $region4: #{calayer_forward.1} parent=0 // loop_header_branch
    %11 = sbr.rel (%p9) target = $region8
  $region5: #{calayer_forward.1} parent=0 // loop_body
    %s13 = ssub.s32 %s8, 1
    %s14 = ssub.s32 %s8, 2
    %s15 = sadd.s32 %s8, 1
    %s16 = ssub.s32 %s8, %s15
    %p17 = scmp.eq.s32.totalorder %s16, 0
    %s19 = sadd.s32 %s18, 1
    %s20 = scalar_select %p17, %s18, %s19
    %p23 = pneg %p17
    %p24 = scmp.eq.s32.totalorder %s8, 1
    %p25 = por %p23, %p24
    %p26 = scmp.ne.s32.totalorder %s18, %s21
    %p27 = scmp.eq.s32.totalorder %s8, 0
    %p28 = por %p26, %p27
    %p29 = scmp.ne.s32.totalorder %s18, %s21
    %p30 = scmp.eq.s32.totalorder %s13, 1
    %p31 = por %p29, %p30
    %p32 = scmp.ne.s32.totalorder %s21, %s22
    %p33 = scmp.eq.s32.totalorder %s13, 0
    %p34 = por %p32, %p33
    %p35 = scmp.ne.s32.totalorder %s21, %s22
    %p36 = scmp.eq.s32.totalorder %s14, 1
    %p37 = por %p35, %p36
    %p39 = scmp.ne.s32.totalorder %s22, %s38
    %p40 = scmp.eq.s32.totalorder %s14, 0
    %p41 = por %p39, %p40
    %s43 = sadd.s32 %s42, 1
    %p46 = scmp.eq.s32.totalorder %s8, 1
    %p47 = scmp.ne.s32.totalorder %s42, %s44
    %p48 = scmp.eq.s32.totalorder %s8, 0
    %p49 = por %p47, %p48
    %p50 = scmp.ne.s32.totalorder %s42, %s44
    %p51 = scmp.eq.s32.totalorder %s13, 1
    %p52 = por %p50, %p51
    %p53 = scmp.ne.s32.totalorder %s44, %s45
    %p54 = scmp.eq.s32.totalorder %s13, 0
    %p55 = por %p53, %p54
    %p56 = scmp.ne.s32.totalorder %s44, %s45
    %p57 = scmp.eq.s32.totalorder %s14, 1
    %p58 = por %p56, %p57
    %p60 = scmp.ne.s32.totalorder %s45, %s59
    %p61 = scmp.eq.s32.totalorder %s14, 0
    %p62 = por %p60, %p61
    %s63 = ssub.s32 %s8, %s15
    %p64 = scmp.eq.s32.totalorder %s63, 0
    %s66 = sadd.s32 %s65, 1
    %s67 = scalar_select %p64, %s65, %s66
    %p70 = pneg %p64
    %p71 = scmp.eq.s32.totalorder %s8, 1
    %p72 = por %p70, %p71
    %p73 = scmp.ne.s32.totalorder %s65, %s68
    %p74 = scmp.eq.s32.totalorder %s8, 0
    %p75 = por %p73, %p74
    %p76 = scmp.ne.s32.totalorder %s65, %s68
    %p77 = scmp.eq.s32.totalorder %s13, 1
    %p78 = por %p76, %p77
    %p79 = scmp.ne.s32.totalorder %s68, %s69
    %p80 = scmp.eq.s32.totalorder %s13, 0
    %p81 = por %p79, %p80
    %p82 = scmp.ne.s32.totalorder %s68, %s69
    %p83 = scmp.eq.s32.totalorder %s14, 1
    %p84 = por %p82, %p83
    %p86 = scmp.ne.s32.totalorder %s69, %s85
    %p87 = scmp.eq.s32.totalorder %s14, 0
    %p88 = por %p86, %p87
    %p89 = scmp.le.s32.totalorder 1, %s8
    %p90 = scmp.lt.s32.totalorder %s8, 3
    %p91 = pnand %p89, %p90
    %p92 = pneg %p91
    // Predicated region
    $region9: #{calayer_forward.1} parent=5 // pred_check
      _
    $region10: #{calayer_forward.1} parent=5 // pred_check_branch
      %94 = sbr.rel (%p91) target = $region12
    $region11: #{calayer_forward.1} parent=5 // pred_region
      %s95 = ssub.s32 %s8, 1
      // Predicated region
      $region13: #{calayer_forward.1} parent=11 // pred_check
        %p96 = pneg %p55
      $region14: #{calayer_forward.1} parent=11 // pred_check_branch
        %98 = sbr.rel (%p96) target = $region16
      $region15: #{calayer_forward.1} parent=11 // pred_region
        _
      $region16: #{calayer_forward.1} parent=11 // pred_fallthru
        _
    $region12: #{calayer_forward.1} parent=5 // pred_fallthru
      _
    %p99 = scmp.lt.s32.totalorder %s8, 2
    // Predicated region
    $region17: #{calayer_forward.1} parent=5 // pred_check
      %p100 = pneg %p99
    $region18: #{calayer_forward.1} parent=5 // pred_check_branch
      %102 = sbr.rel (%p100) target = $region20
    $region19: #{calayer_forward.1} parent=5 // pred_region
      // Predicated region
      $region21: #{calayer_forward.1} parent=19 // pred_check
        %p103 = pneg %p28
      $region22: #{calayer_forward.1} parent=19 // pred_check_branch
        %105 = sbr.rel (%p103) target = $region24
      $region23: #{calayer_forward.1} parent=19 // pred_region
        %p106 = scmp.lt.s32.totalorder %s8, 1
        %s107 = scalar_select %p106, %s8, 1
        %s108 = smul.addr %s107, 8
        %s109 = smul.addr %s108, 8
        %s110 = scalar_lea.vmem %s0, %s109
      $region24: #{calayer_forward.1} parent=19 // pred_fallthru
        _
    $region20: #{calayer_forward.1} parent=5 // pred_fallthru
      _
    %p111 = scmp.le.s32.totalorder 1, %s8
    %p112 = scmp.lt.s32.totalorder %s8, 3
    %p113 = pnand %p111, %p112
    %p114 = pneg %p113
    // Predicated region
    $region25: #{calayer_forward.1} parent=5 // pred_check
      _
    $region26: #{calayer_forward.1} parent=5 // pred_check_branch
      %116 = sbr.rel (%p113) target = $region28
    $region27: #{calayer_forward.1} parent=5 // pred_region
      %s117 = ssub.s32 %s8, 1
      %p118 = scmp.lt.s32.totalorder %s13, 1
      %s119 = scalar_select %p118, %s13, 1
      %s120 = smul.addr %s119, 8
      %s121 = smul.addr %s120, 8
      %s122 = scalar_lea.vmem %s0, %s121
      %p123 = pneg %p34
      %p124 = pneg %p31
      %p125 = pneg %p55
      %p126 = pneg %p52
      %p127 = pneg %p81
      %p128 = pneg %p78
      %p129 = scmp.lt.s32.totalorder %s13, 1
      %s130 = scalar_select %p129, %s13, 1
      %s131 = smul.addr %s130, 8
      %s132 = smul.addr %s131, 8
      %s133 = scalar_lea.vmem %s2, %s132
      %p134 = scmp.lt.s32.totalorder %s13, 1
      %s135 = scalar_select %p134, %s13, 1
      %s136 = smul.addr %s135, 8
      %s137 = smul.addr %s136, 8
      %s138 = scalar_lea.vmem %s0, %s137
      %p139 = scmp.lt.s32.totalorder %s13, 1
      %s140 = scalar_select %p139, %s13, 1
      %s141 = smul.addr %s140, 8
      %s142 = smul.addr %s141, 8
      %s143 = scalar_lea.vmem %s2, %s142
      %v144 = vld [vmem:[%s1] sm:$0xff]
      %v145 = vld [vmem:[%s1 + $0x8] sm:$0xff]
      %v146 = vld [vmem:[%s1 + $0x10] sm:$0xff]
      %v147 = vld [vmem:[%s1 + $0x18] sm:$0xff]
      %v148 = vld [vmem:[%s1] sm:$0x1]
      %v149 = vld [vmem:[%s138] sm:$0xff]
      %v150 = vld [vmem:[%s138 + $0x8] sm:$0xff]
      %v151 = vld [vmem:[%s138 + $0x10] sm:$0xff]
      %v152 = vld [vmem:[%s138 + $0x18] sm:$0xff]
      %v153 = vld [vmem:[%s138 + $0x20] sm:$0xff]
      %v154 = vld [vmem:[%s138 + $0x28] sm:$0xff]
      %v155 = vld [vmem:[%s138 + $0x30] sm:$0xff]
      %v156 = vld [vmem:[%s138 + $0x38] sm:$0xff]
      %v157 = vadd.f32 %v149, %v150
      %158 = vadd.xlane.f32.xlu0 %v157
      %v159 = vpop.xlane.xlu0 %158
      %v160 = vadd.f32 %v151, %v152
      %161 = vadd.xlane.f32.xlu0 %v160
      %v162 = vpop.xlane.xlu0 %161
      %v163 = vadd.f32 %v153, %v154
      %164 = vadd.xlane.f32.xlu0 %v163
      %v165 = vpop.xlane.xlu0 %164
      %v166 = vadd.f32 %v155, %v156
      %167 = vadd.xlane.f32.xlu0 %v166
      %v168 = vpop.xlane.xlu0 %167
      %v169 = vmul.f32 %v159, 0.00390625
      %v170 = vmul.f32 %v162, 0.00390625
      %v171 = vmul.f32 %v165, 0.00390625
      %v172 = vmul.f32 %v168, 0.00390625
      %v173 = vmul.f32 %v169, %v144
      %v174 = vmul.f32 %v170, %v145
      %v175 = vmul.f32 %v171, %v146
      %v176 = vmul.f32 %v172, %v147
      %vm177 = vcmask 15360
      %v178 = vsel %vm177, %v173, 0.0
      %v179 = vsel %vm177, %v174, 0.0
      %v180 = vadd.f32 %v178, %v179
      %v181 = vsel %vm177, %v175, 0.0
      %v182 = vadd.f32 %v180, %v181
      %v183 = vsel %vm177, %v176, 0.0
      %v184 = vadd.f32 %v182, %v183
      %v185 = vrot.slane %v184, 4
      %v186 = vadd.f32 %v184, %v185
      %v187 = vrot.slane %v186, 2
      %v188 = vadd.f32 %v186, %v187
      %v189 = vrot.slane %v188, 1
      %v190 = vadd.f32 %v188, %v189
      %192 = vrot.lane.b32.xlu0 %v148, 123
      %v193 = vpop.permute.xlu0 %192
      %v195 = vadd.f32 %v190, %v193
      %v196 = vmax.f32 %v195, 0.0
      %v197 = vlaneseq
      %v198 = vshrl.u32 %v197, 7
      %v199 = vsub.s32 0, %v198
      %v200 = vrot.slane %v196, %v199
      %202 = vrot.lane.b32.xlu0 %v200, 2
      %v203 = vpop.permute.xlu0 %202
      %v205 = vmul.f32 %v144, %v203
      %v206 = vmul.f32 %v145, %v203
      %v207 = vmul.f32 %v146, %v203
      %v208 = vmul.f32 %v147, %v203
      %213 = vrot.lane.b32.xlu0 %v205, 126
      %v214 = vpop.permute.xlu0 %213
      %215 = vrot.lane.b32.xlu0 %v206, 126
      %v216 = vpop.permute.xlu0 %215
      %217 = vrot.lane.b32.xlu0 %v207, 126
      %v218 = vpop.permute.xlu0 %217
      %219 = vrot.lane.b32.xlu0 %v208, 126
      %v220 = vpop.permute.xlu0 %219
      %v225 = vsel %vm177, %v214, 0.0
      %226 = vadd.xlane.f32.xlu0 %v225
      %v227 = vpop.xlane.xlu0 %226
      %v228 = vsel %vm177, %v216, 0.0
      %229 = vadd.xlane.f32.xlu0 %v228
      %v230 = vpop.xlane.xlu0 %229
      %v231 = vsel %vm177, %v218, 0.0
      %232 = vadd.xlane.f32.xlu0 %v231
      %v233 = vpop.xlane.xlu0 %232
      %v234 = vsel %vm177, %v220, 0.0
      %235 = vadd.xlane.f32.xlu0 %v234
      %v236 = vpop.xlane.xlu0 %235
      %v237 = vadd.f32 %v227, %v144
      %v238 = vadd.f32 %v230, %v145
      %v239 = vadd.f32 %v233, %v146
      %v240 = vadd.f32 %v236, %v147
      %v241 = vsub.f32 0.0, %v237
      %v242 = vsub.f32 0.0, %v238
      %v243 = vsub.f32 0.0, %v239
      %v244 = vsub.f32 0.0, %v240
      %v245 = vmul.f32 %v241, 1.442695
      %v246 = vpow.pop %v245
      %v247 = vmul.f32 %v242, 1.442695
      %v248 = vpow.pop %v247
      %v249 = vmul.f32 %v243, 1.442695
      %v250 = vpow.pop %v249
      %v251 = vmul.f32 %v244, 1.442695
      %v252 = vpow.pop %v251
      %v253 = vadd.f32 %v246, 1.0
      %v254 = vadd.f32 %v248, 1.0
      %v255 = vadd.f32 %v250, 1.0
      %v256 = vadd.f32 %v252, 1.0
      %v257 = vrcp.pop %v253
      %v258 = vmul.f32 1.0, %v257
      %v259 = vrcp.pop %v254
      %v260 = vmul.f32 1.0, %v259
      %v261 = vrcp.pop %v255
      %v262 = vmul.f32 1.0, %v261
      %v263 = vrcp.pop %v256
      %v264 = vmul.f32 1.0, %v263
      %266 = vset.pattern.permute.xlu0 4
      %267 = vperm.xlu0 %266, %v258
      %v268 = vpop.permute.xlu0 %267
      %271 = vset.pattern.permute.xlu0 4
      %272 = vperm.xlu0 %271, %v260
      %v273 = vpop.permute.xlu0 %272
      %276 = vset.pattern.permute.xlu0 4
      %277 = vperm.xlu0 %276, %v262
      %v278 = vpop.permute.xlu0 %277
      %281 = vset.pattern.permute.xlu0 4
      %282 = vperm.xlu0 %281, %v264
      %v283 = vpop.permute.xlu0 %282
      %v285 = vmul.f32 %v149, %v268
      %v286 = vmul.f32 %v150, %v268
      %v287 = vmul.f32 %v151, %v273
      %v288 = vmul.f32 %v152, %v273
      %v289 = vmul.f32 %v153, %v278
      %v290 = vmul.f32 %v154, %v278
      %v291 = vmul.f32 %v155, %v283
      %v292 = vmul.f32 %v156, %v283
      %293 = vst [vmem:[%s143] sm:$0xff] %v285
      %294 = vst [vmem:[%s143 + $0x8] sm:$0xff] %v286
      %295 = vst [vmem:[%s143 + $0x10] sm:$0xff] %v287
      %296 = vst [vmem:[%s143 + $0x18] sm:$0xff] %v288
      %297 = vst [vmem:[%s143 + $0x20] sm:$0xff] %v289
      %298 = vst [vmem:[%s143 + $0x28] sm:$0xff] %v290
      %299 = vst [vmem:[%s143 + $0x30] sm:$0xff] %v291
      %300 = vst [vmem:[%s143 + $0x38] sm:$0xff] %v292
      %p301 = scmp.lt.s32.totalorder %s13, 1
      %s302 = scalar_select %p301, %s13, 1
      %s303 = smul.addr %s302, 8
      %s304 = smul.addr %s303, 8
      %s305 = scalar_lea.vmem %s2, %s304
      // Predicated region
      $region29: #{calayer_forward.1} parent=27 // pred_check
        %p306 = pneg %p78
      $region30: #{calayer_forward.1} parent=27 // pred_check_branch
        %308 = sbr.rel (%p306) target = $region32
      $region31: #{calayer_forward.1} parent=27 // pred_region
        _
      $region32: #{calayer_forward.1} parent=27 // pred_fallthru
        _
    $region28: #{calayer_forward.1} parent=5 // pred_fallthru
      _
    %p309 = scmp.le.s32.totalorder 2, %s8
    // Predicated region
    $region33: #{calayer_forward.1} parent=5 // pred_check
      %p310 = pneg %p309
    $region34: #{calayer_forward.1} parent=5 // pred_check_branch
      %312 = sbr.rel (%p310) target = $region36
    $region35: #{calayer_forward.1} parent=5 // pred_region
      %s313 = ssub.s32 %s8, 2
      // Predicated region
      $region37: #{calayer_forward.1} parent=35 // pred_check
        %p314 = pneg %p84
      $region38: #{calayer_forward.1} parent=35 // pred_check_branch
        %316 = sbr.rel (%p314) target = $region40
      $region39: #{calayer_forward.1} parent=35 // pred_region
        %p317 = scmp.lt.s32.totalorder %s14, 1
        %s318 = scalar_select %p317, %s14, 1
        %s319 = smul.addr %s318, 8
        %s320 = smul.addr %s319, 8
        %s321 = scalar_lea.vmem %s2, %s320
      $region40: #{calayer_forward.1} parent=35 // pred_fallthru
        _
    $region36: #{calayer_forward.1} parent=5 // pred_fallthru
      _
  $region6: #{calayer_forward.1} parent=0 // loop_footer
    %s12 = sadd.s32 1, %s8
  $region7: #{calayer_forward.1} parent=0 // loop_footer_branch
    %7 = sbr.rel target = $region3
  $region8: #{calayer_forward.1} parent=0 // loop_exit
    _

</llo_original>
